<compile_context>
chip_gen: v7x
topology: tpu7x:2x2x1
jax: 0.10.0
libtpu: 0.0.40
codegen_flags: <defaults>
</compile_context>

<pallas_src>
import functools
import math

import jax
import jax.numpy as jnp
from jax.experimental import pallas as pl
from jax.experimental.pallas import tpu as pltpu

# ----------------------------- model config ---------------------------------
VOCAB = 128       # toy char-level vocab (lane-aligned: 128)
D_MODEL = 32      # hidden size
D_FF = 64         # feed-forward width
PAD_ID = 0        # pad == eos token id (mirrors pad_token_id=eos_token_id)
NEG_BIG = -1e30


# ----------------------------- Pallas kernel --------------------------------
def decode_kernel(x_ref, embT_ref, wqkv_ref, wo_ref, w1_ref, w2_ref, wlm_ref,
                  bias_ref,                                   # VMEM inputs
                  gen_ref,                                    # VMEM output (B,1,T) int32
                  kv_cache,                                   # VMEM scratch (B,S,2D)
                  *, prompt_len, max_new_tokens):
    """Full greedy decode for a tiny 1-layer causal decoder LM, batched over B."""
    B, S, D = x_ref.shape
    V = wlm_ref.shape[1]
    T = max_new_tokens

    # ---- hoisted loop-invariant loads (no per-step re-vld of the weights) ----
    wqkv = wqkv_ref[...]          # (D, 3D); q-columns pre-scaled by 1/sqrt(D) on host
    wo = wo_ref[...]              # (D, D)
    w1 = w1_ref[...]              # (D, F)
    w2 = w2_ref[...]              # (F, D)
    wlm = wlm_ref[...]            # (D, V)
    embT = embT_ref[...]          # (D, V)  lane-dense transposed embedding
    bias = bias_ref[...]          # (B, 1, S) additive start mask (0 / -1e30)

    col3 = jax.lax.broadcasted_iota(jnp.int32, (1, 1, S), 2)
    vidx_f = jax.lax.broadcasted_iota(jnp.int32, (1, 1, V), 2).astype(jnp.float32)
    tidx = jax.lax.broadcasted_iota(jnp.int32, (1, 1, T), 2)

    # -------- prefill: K/V for the whole buffer, one batched matmul ----------
    # Whole-S prefill (instead of prompt_len rows only) keeps every cache row
    # finite, so masked positions (p == 0) can never inject 0*NaN via p @ V.
    x = x_ref[...]                                                    # (B, S, D)
    kv_cache[...] = jax.lax.dot_general(
        x, wqkv[:, D:], (((2,), (0,)), ((), ())),
        preferred_element_type=jnp.float32)                           # (B, S, 2D)

    x_cur0 = x[:, prompt_len - 1:prompt_len, :]                       # (B, 1, D)
    gen0 = jnp.zeros((B, 1, T), jnp.int32)

    # ---------------- greedy decode: serial fori_loop over tokens ------------
    def step(t, carry):
        x_cur, gen_acc = carry                                        # (B,1,D),(B,1,T)
        pos = prompt_len - 1 + t

        # fused QKV for the whole batch in one matmul
        qkv = jax.lax.dot_general(
            x_cur, wqkv, (((2,), (0,)), ((), ())),
            preferred_element_type=jnp.float32)                       # (B, 1, 3D)
        q = qkv[:, :, :D]
        # single contiguous K|V write into the fused cache
        kv_cache[:, pl.ds(pos, 1), :] = qkv[:, :, D:]

        kv_all = kv_cache[...]                                        # (B, S, 2D)
        k = kv_all[:, :, :D]
        v = kv_all[:, :, D:]

        # attention on the single current query row per batch (batched matmuls)
        scores = jax.lax.dot_general(
            q, k, (((2,), (2,)), ((0,), (0,))),
            preferred_element_type=jnp.float32)                       # (B, 1, S)
        scores = jnp.where(col3 <= pos, scores + bias, jnp.float32(NEG_BIG))
        scores = scores - jnp.max(scores, axis=-1, keepdims=True)
        p = jnp.exp(scores)
        p = p * pl.reciprocal(jnp.sum(p, axis=-1, keepdims=True), approx=True)
        attn = jax.lax.dot_general(
            p, v, (((2,), (1,)), ((0,), (0,))),
            preferred_element_type=jnp.float32)                       # (B, 1, D)

        # residual + FFN + LM head, batched over B
        h = x_cur + jax.lax.dot_general(
            attn, wo, (((2,), (0,)), ((), ())),
            preferred_element_type=jnp.float32)
        ff = jnp.maximum(jax.lax.dot_general(
            h, w1, (((2,), (0,)), ((), ())),
            preferred_element_type=jnp.float32), 0.0)
        h = h + jax.lax.dot_general(
            ff, w2, (((2,), (0,)), ((), ())),
            preferred_element_type=jnp.float32)
        logits = jax.lax.dot_general(
            h, wlm, (((2,), (0,)), ((), ())),
            preferred_element_type=jnp.float32)                       # (B, 1, V)

        # greedy argmax with lowest-index tie break (== jnp.argmax)
        mx = jnp.max(logits, axis=-1, keepdims=True)                  # (B, 1, 1)
        nxt_f = jnp.min(jnp.where(logits == mx, vidx_f, jnp.float32(V)),
                        axis=-1, keepdims=True)                       # (B, 1, 1)
        nxt_i = nxt_f.astype(jnp.int32)
        gen_acc = jnp.where(tidx == t, nxt_i, gen_acc)                # (B, 1, T)

        # feed back: one-hot @ emb^T (lane-dense (D,V) weight, trans-rhs matmul)
        oh = (vidx_f == nxt_f).astype(jnp.float32)                    # (B, 1, V)
        x_new = jax.lax.dot_general(
            oh, embT, (((2,), (1,)), ((), ())),
            preferred_element_type=jnp.float32)                       # (B, 1, D)
        return x_new, gen_acc

    # TODO(synk): no EOS early-stop — HF generate() would stop at eos_token_id;
    # here the host decode strips pads instead.
    _, gen_final = jax.lax.fori_loop(0, T, step, (x_cur0, gen0))
    gen_ref[...] = gen_final                                          # one store


@functools.partial(jax.jit, static_argnames=("prompt_len", "max_new_tokens"))
def generate_tokens(params, tokens, start, prompt_len, max_new_tokens):
    """Single fused Pallas call performing the whole greedy generation."""
    B, S = tokens.shape
    D = params["wq"].shape[0]
    scale = jnp.float32(1.0 / math.sqrt(D))

    # one-time embedding of the (padded) prompt buffer + fused QKV weight
    x = jnp.take(params["emb"], tokens, axis=0).astype(jnp.float32)   # (B, S, D)
    # fold the 1/sqrt(D) attention scale into the Q projection
    w_qkv = jnp.concatenate([params["wq"] * scale, params["wk"], params["wv"]],
                            axis=1)                                   # (D, 3D)
    emb_t = params["emb"].T                                           # (D, V) lane-dense
    # t-invariant half of the causal/pad mask, as an additive bias
    start_bias = jnp.where(
        jnp.arange(S, dtype=jnp.int32)[None, None, :] >= start[:, None, None],
        jnp.float32(0.0), jnp.float32(NEG_BIG))                       # (B, 1, S)

    kernel = functools.partial(decode_kernel, prompt_len=prompt_len,
                               max_new_tokens=max_new_tokens)
    vspec = pl.BlockSpec(memory_space=pltpu.MemorySpace.VMEM)

    # Gridless single-program kernel: at B=2 / D=32 everything fits in a few KB
    # of VMEM.  For larger B on v7x, add a leading "parallel" batch grid axis
    # so both TensorCores are used, and re-derive the cache size vs 64 MiB VMEM.
    gen = pl.pallas_call(
        kernel,
        out_shape=jax.ShapeDtypeStruct((B, 1, max_new_tokens), jnp.int32),
        in_specs=[vspec] * 8,
        out_specs=vspec,
        scratch_shapes=[
            pltpu.VMEM((B, S, 2 * D), jnp.float32),   # fused K|V cache
        ],
    )(x, emb_t, w_qkv, params["wo"], params["w1"], params["w2"],
      params["w_lm"], start_bias)
    return gen.reshape(B, max_new_tokens)


# ------------------------ host-side "tokenizer" ------------------------------
# TODO(synk): HF tokenizer string ops (prompt.replace, padding, batch_decode)
# have no Pallas equivalent; they are reproduced as host-side Python.
def toy_encode(texts):
    """Char-level encode with LEFT padding (pad id 0).  Returns ids, starts."""
    id_lists = [[(ord(c) % 127) + 1 for c in t] for t in texts]
    max_len = max(len(ids) for ids in id_lists)
    padded, starts = [], []
    for ids in id_lists:
        n_pad = max_len - len(ids)
        padded.append([PAD_ID] * n_pad + ids)
        starts.append(n_pad)
    return padded, starts, max_len


def toy_decode(id_rows):
    out = []
    for row in id_rows:
        out.append("".join(chr(int(i) - 1) for i in row if int(i) != PAD_ID))
    return out


# ------------------------------ "generate" ----------------------------------
def init_params(key):
    ks = jax.random.split(key, 8)
    s = 0.05
    return {
        "emb":  jax.random.normal(ks[0], (VOCAB, D_MODEL), jnp.float32) * s,
        "wq":   jax.random.normal(ks[1], (D_MODEL, D_MODEL), jnp.float32) * s,
        "wk":   jax.random.normal(ks[2], (D_MODEL, D_MODEL), jnp.float32) * s,
        "wv":   jax.random.normal(ks[3], (D_MODEL, D_MODEL), jnp.float32) * s,
        "wo":   jax.random.normal(ks[4], (D_MODEL, D_MODEL), jnp.float32) * s,
        "w1":   jax.random.normal(ks[5], (D_MODEL, D_FF), jnp.float32) * s,
        "w2":   jax.random.normal(ks[6], (D_FF, D_MODEL), jnp.float32) * s,
        "w_lm": jax.random.normal(ks[7], (D_MODEL, VOCAB), jnp.float32) * s,
    }


def paraphraser_forward(params, prompt, batch, max_new_tokens):
    """Mirrors paraphraser.forward: template substitution -> tokenize ->
    greedy generate (single fused Pallas kernel) -> batch_decode."""
    texts = [prompt.replace("$sentence", t) for t in batch["template"]]
    padded_ids, starts, prompt_len = toy_encode(texts)

    B = len(texts)
    S = ((prompt_len + max_new_tokens + 7) // 8) * 8   # padded seq/cache buffer

    prompt_tokens = jnp.asarray(padded_ids, jnp.int32)            # (B, prompt_len)
    buf = jnp.full((B, S), PAD_ID, dtype=jnp.int32)
    buf = buf.at[:, :prompt_len].set(prompt_tokens)
    start = jnp.asarray(starts, jnp.int32)

    gen = generate_tokens(params, buf, start, prompt_len, max_new_tokens)
    gen = jax.block_until_ready(gen)

    tokens = jnp.concatenate([prompt_tokens, gen], axis=1)        # prompt + generated
    target_sentence = toy_decode(list(jax.device_get(tokens)))
    return target_sentence, tokens


# --------------------------------- main --------------------------------------
if __name__ == "__main__":
    key = jax.random.PRNGKey(0)
    params = init_params(key)

    prompt = "Paraphrase: $sentence"
    batch = {"template": ["hello world", "jax on tpu"]}
    max_new_tokens = 8

    target_sentence, tokens = paraphraser_forward(
        params, prompt, batch, max_new_tokens)
    tokens = jax.block_until_ready(tokens)

    assert len(target_sentence) == 2
    assert tokens.shape[1] == 23 + max_new_tokens          # prompt_len + new tokens
    assert bool(jnp.all((tokens >= 0) & (tokens < VOCAB)))
    print("KERNEL_OK")
</pallas_src>

<mosaic_0001>
module attributes {stable_mosaic.version = 11 : i64} {
  func.func @decode_kernel(%arg0: memref<2x32x32xf32, #tpu.memory_space<vmem>>, %arg1: memref<32x128xf32, #tpu.memory_space<vmem>>, %arg2: memref<32x96xf32, #tpu.memory_space<vmem>>, %arg3: memref<32x32xf32, #tpu.memory_space<vmem>>, %arg4: memref<32x64xf32, #tpu.memory_space<vmem>>, %arg5: memref<64x32xf32, #tpu.memory_space<vmem>>, %arg6: memref<32x128xf32, #tpu.memory_space<vmem>>, %arg7: memref<2x1x32xf32, #tpu.memory_space<vmem>>, %arg8: memref<2x1x8xi32, #tpu.memory_space<vmem>>, %arg9: memref<2x32x64xf32, #tpu.memory_space<vmem>>) attributes {dimension_semantics = [], scalar_prefetch = 0 : i64, scratch_operands = 1 : i64, tpu.core_type = #tpu.core_type<tc>} {
    %c0 = arith.constant 0 : index
    %c0_0 = arith.constant 0 : index
    %0 = vector.load %arg2[%c0, %c0_0] : memref<32x96xf32, #tpu.memory_space<vmem>>, vector<32x96xf32>
    %c0_1 = arith.constant 0 : index
    %c0_2 = arith.constant 0 : index
    %1 = vector.load %arg3[%c0_1, %c0_2] : memref<32x32xf32, #tpu.memory_space<vmem>>, vector<32x32xf32>
    %c0_3 = arith.constant 0 : index
    %c0_4 = arith.constant 0 : index
    %2 = vector.load %arg4[%c0_3, %c0_4] : memref<32x64xf32, #tpu.memory_space<vmem>>, vector<32x64xf32>
    %c0_5 = arith.constant 0 : index
    %c0_6 = arith.constant 0 : index
    %3 = vector.load %arg5[%c0_5, %c0_6] : memref<64x32xf32, #tpu.memory_space<vmem>>, vector<64x32xf32>
    %c0_7 = arith.constant 0 : index
    %c0_8 = arith.constant 0 : index
    %4 = vector.load %arg6[%c0_7, %c0_8] : memref<32x128xf32, #tpu.memory_space<vmem>>, vector<32x128xf32>
    %c0_9 = arith.constant 0 : index
    %c0_10 = arith.constant 0 : index
    %5 = vector.load %arg1[%c0_9, %c0_10] : memref<32x128xf32, #tpu.memory_space<vmem>>, vector<32x128xf32>
    %c0_11 = arith.constant 0 : index
    %c0_12 = arith.constant 0 : index
    %c0_13 = arith.constant 0 : index
    %6 = vector.load %arg7[%c0_11, %c0_12, %c0_13] : memref<2x1x32xf32, #tpu.memory_space<vmem>>, vector<2x1x32xf32>
    %7 = tpu.iota {dimensions = array<i32: 2>} : vector<1x1x32xi32>
    %8 = tpu.iota {dimensions = array<i32: 2>} : vector<1x1x128xi32>
    %9 = arith.sitofp %8 : vector<1x1x128xi32> to vector<1x1x128xf32>
    %10 = tpu.iota {dimensions = array<i32: 2>} : vector<1x1x8xi32>
    %c0_14 = arith.constant 0 : index
    %c0_15 = arith.constant 0 : index
    %c0_16 = arith.constant 0 : index
    %11 = vector.load %arg0[%c0_14, %c0_15, %c0_16] : memref<2x32x32xf32, #tpu.memory_space<vmem>>, vector<2x32x32xf32>
    %12 = vector.extract_strided_slice %0 {offsets = [0, 32], sizes = [32, 64], strides = [1, 1]} : vector<32x96xf32> to vector<32x64xf32>
    %cst = arith.constant dense<0.000000e+00> : vector<2x32x64xf32>
    %13 = tpu.matmul %11, %12, %cst {dimension_numbers = #tpu.dot_dimension_numbers<[2], [0], [0, 1], [1], [0, 0, 0, 1, 1, 1], [], []>} : vector<2x32x32xf32>, vector<32x64xf32>, vector<2x32x64xf32> -> vector<2x32x64xf32>
    %c0_17 = arith.constant 0 : index
    %c0_18 = arith.constant 0 : index
    %c0_19 = arith.constant 0 : index
    %14 = vector.load %arg9[%c0_17, %c0_18, %c0_19] : memref<2x32x64xf32, #tpu.memory_space<vmem>>, vector<2x32x64xf32>
    tpu.vector_store %arg9[%c0_17, %c0_18, %c0_19], %13 {strides = array<i32>} : memref<2x32x64xf32, #tpu.memory_space<vmem>>, vector<2x32x64xf32>,
    %15 = vector.extract_strided_slice %11 {offsets = [0, 22, 0], sizes = [2, 1, 32], strides = [1, 1, 1]} : vector<2x32x32xf32> to vector<2x1x32xf32>
    %c0_i32 = arith.constant 0 : i32
    %16 = vector.broadcast %c0_i32 : i32 to vector<2x1x8xi32>
    %c0_i32_20 = arith.constant 0 : i32
    %c8_i32 = arith.constant 8 : i32
    %17 = arith.addi %c0_i32_20, %c8_i32 : i32
    %c1_i32 = arith.constant 1 : i32
    %18:2 = scf.for %arg10 = %c0_i32_20 to %17 step %c1_i32 iter_args(%arg11 = %15, %arg12 = %16) -> (vector<2x1x32xf32>, vector<2x1x8xi32>)  : i32 {
      %c22_i32 = arith.constant 22 : i32
      %20 = arith.addi %c22_i32, %arg10 : i32
      %cst_25 = arith.constant dense<0.000000e+00> : vector<2x1x96xf32>
      %21 = tpu.matmul %arg11, %0, %cst_25 {dimension_numbers = #tpu.dot_dimension_numbers<[2], [0], [0, 1], [1], [0, 0, 0, 1, 1, 1], [], []>} : vector<2x1x32xf32>, vector<32x96xf32>, vector<2x1x96xf32> -> vector<2x1x96xf32>
      %22 = vector.extract_strided_slice %21 {offsets = [0, 0, 0], sizes = [2, 1, 32], strides = [1, 1, 1]} : vector<2x1x96xf32> to vector<2x1x32xf32>
      %23 = vector.extract_strided_slice %21 {offsets = [0, 0, 32], sizes = [2, 1, 64], strides = [1, 1, 1]} : vector<2x1x96xf32> to vector<2x1x64xf32>
      %c0_26 = arith.constant 0 : index
      %24 = arith.index_cast %20 : i32 to index
      %c0_27 = arith.constant 0 : index
      %25 = vector.load %arg9[%c0_26, %24, %c0_27] : memref<2x32x64xf32, #tpu.memory_space<vmem>>, vector<2x1x64xf32>
      tpu.vector_store %arg9[%c0_26, %24, %c0_27], %23 {strides = array<i32>} : memref<2x32x64xf32, #tpu.memory_space<vmem>>, vector<2x1x64xf32>,
      %c0_28 = arith.constant 0 : index
      %c0_29 = arith.constant 0 : index
      %c0_30 = arith.constant 0 : index
      %26 = vector.load %arg9[%c0_28, %c0_29, %c0_30] : memref<2x32x64xf32, #tpu.memory_space<vmem>>, vector<2x32x64xf32>
      %27 = vector.extract_strided_slice %26 {offsets = [0, 0, 0], sizes = [2, 32, 32], strides = [1, 1, 1]} : vector<2x32x64xf32> to vector<2x32x32xf32>
      %28 = vector.extract_strided_slice %26 {offsets = [0, 0, 32], sizes = [2, 32, 32], strides = [1, 1, 1]} : vector<2x32x64xf32> to vector<2x32x32xf32>
      %cst_31 = arith.constant dense<0.000000e+00> : vector<2x1x32xf32>
      %29 = tpu.matmul %22, %27, %cst_31 {dimension_numbers = #tpu.dot_dimension_numbers<[2], [2], [1], [1], [0, 0, 0, 1, 1, 1], [0], [0]>} : vector<2x1x32xf32>, vector<2x32x32xf32>, vector<2x1x32xf32> -> vector<2x1x32xf32>
      %30 = vector.broadcast %20 : i32 to vector<1x1x32xi32>
      %31 = arith.cmpi sle, %7, %30 : vector<1x1x32xi32>
      %32 = arith.addf %29, %6 : vector<2x1x32xf32>
      %cst_32 = arith.constant -1.000000e+30 : f32
      %33 = vector.shape_cast %31 : vector<1x1x32xi1> to vector<1x1x32xi1>
      %34 = vector.broadcast %33 : vector<1x1x32xi1> to vector<2x1x32xi1>
      %35 = vector.broadcast %cst_32 : f32 to vector<2x1x32xf32>
      %36 = arith.select %34, %32, %35 : vector<2x1x32xi1>, vector<2x1x32xf32>
      %cst_33 = arith.constant dense<0xFF800000> : vector<2x1xf32>
      %37 = vector.multi_reduction <maximumf>, %36, %cst_33 [2] : vector<2x1x32xf32> to vector<2x1xf32>
      %38 = vector.shape_cast %37 : vector<2x1xf32> to vector<2x1x1xf32>
      %39 = vector.broadcast %38 : vector<2x1x1xf32> to vector<2x1x32xf32>
      %40 = arith.subf %36, %39 : vector<2x1x32xf32>
      %41 = math.exp %40 : vector<2x1x32xf32>
      %cst_34 = arith.constant dense<0.000000e+00> : vector<2x1xf32>
      %42 = vector.multi_reduction <add>, %41, %cst_34 [2] : vector<2x1x32xf32> to vector<2x1xf32>
      %43 = vector.shape_cast %42 : vector<2x1xf32> to vector<2x1x1xf32>
      %44 = tpu.reciprocal %43 {approx = true} : vector<2x1x1xf32> -> vector<2x1x1xf32>
      %45 = vector.broadcast %44 : vector<2x1x1xf32> to vector<2x1x32xf32>
      %46 = arith.mulf %41, %45 : vector<2x1x32xf32>
      %cst_35 = arith.constant dense<0.000000e+00> : vector<2x1x32xf32>
      %47 = tpu.matmul %46, %28, %cst_35 {dimension_numbers = #tpu.dot_dimension_numbers<[2], [1], [1], [2], [0, 0, 0, 1, 1, 2], [0], [0]>} : vector<2x1x32xf32>, vector<2x32x32xf32>, vector<2x1x32xf32> -> vector<2x1x32xf32>
      %cst_36 = arith.constant dense<0.000000e+00> : vector<2x1x32xf32>
      %48 = tpu.matmul %47, %1, %cst_36 {dimension_numbers = #tpu.dot_dimension_numbers<[2], [0], [0, 1], [1], [0, 0, 0, 1, 1, 1], [], []>} : vector<2x1x32xf32>, vector<32x32xf32>, vector<2x1x32xf32> -> vector<2x1x32xf32>
      %49 = arith.addf %arg11, %48 : vector<2x1x32xf32>
      %cst_37 = arith.constant dense<0.000000e+00> : vector<2x1x64xf32>
      %50 = tpu.matmul %49, %2, %cst_37 {dimension_numbers = #tpu.dot_dimension_numbers<[2], [0], [0, 1], [1], [0, 0, 0, 1, 1, 1], [], []>} : vector<2x1x32xf32>, vector<32x64xf32>, vector<2x1x64xf32> -> vector<2x1x64xf32>
      %cst_38 = arith.constant 0.000000e+00 : f32
      %51 = vector.broadcast %cst_38 : f32 to vector<2x1x64xf32>
      %52 = arith.maximumf %50, %51 : vector<2x1x64xf32>
      %cst_39 = arith.constant dense<0.000000e+00> : vector<2x1x32xf32>
      %53 = tpu.matmul %52, %3, %cst_39 {dimension_numbers = #tpu.dot_dimension_numbers<[2], [0], [0, 1], [1], [0, 0, 0, 1, 1, 1], [], []>} : vector<2x1x64xf32>, vector<64x32xf32>, vector<2x1x32xf32> -> vector<2x1x32xf32>
      %54 = arith.addf %49, %53 : vector<2x1x32xf32>
      %cst_40 = arith.constant dense<0.000000e+00> : vector<2x1x128xf32>
      %55 = tpu.matmul %54, %4, %cst_40 {dimension_numbers = #tpu.dot_dimension_numbers<[2], [0], [0, 1], [1], [0, 0, 0, 1, 1, 1], [], []>} : vector<2x1x32xf32>, vector<32x128xf32>, vector<2x1x128xf32> -> vector<2x1x128xf32>
      %cst_41 = arith.constant dense<0xFF800000> : vector<2x1xf32>
      %56 = vector.multi_reduction <maximumf>, %55, %cst_41 [2] : vector<2x1x128xf32> to vector<2x1xf32>
      %57 = vector.shape_cast %56 : vector<2x1xf32> to vector<2x1x1xf32>
      %58 = vector.broadcast %57 : vector<2x1x1xf32> to vector<2x1x128xf32>
      %59 = arith.cmpf oeq, %55, %58 : vector<2x1x128xf32>
      %cst_42 = arith.constant 1.280000e+02 : f32
      %60 = vector.shape_cast %9 : vector<1x1x128xf32> to vector<1x1x128xf32>
      %61 = vector.broadcast %60 : vector<1x1x128xf32> to vector<2x1x128xf32>
      %62 = vector.broadcast %cst_42 : f32 to vector<2x1x128xf32>
      %63 = arith.select %59, %61, %62 : vector<2x1x128xi1>, vector<2x1x128xf32>
      %cst_43 = arith.constant dense<0x7F800000> : vector<2x1xf32>
      %64 = vector.multi_reduction <minimumf>, %63, %cst_43 [2] : vector<2x1x128xf32> to vector<2x1xf32>
      %65 = vector.shape_cast %64 : vector<2x1xf32> to vector<2x1x1xf32>
      %66 = arith.fptosi %65 : vector<2x1x1xf32> to vector<2x1x1xi32>
      %67 = vector.broadcast %arg10 : i32 to vector<1x1x8xi32>
      %68 = arith.cmpi eq, %10, %67 : vector<1x1x8xi32>
      %69 = vector.shape_cast %68 : vector<1x1x8xi1> to vector<1x1x8xi1>
      %70 = vector.broadcast %69 : vector<1x1x8xi1> to vector<2x1x8xi1>
      %71 = vector.shape_cast %66 : vector<2x1x1xi32> to vector<2x1x1xi32>
      %72 = vector.broadcast %71 : vector<2x1x1xi32> to vector<2x1x8xi32>
      %73 = arith.select %70, %72, %arg12 : vector<2x1x8xi1>, vector<2x1x8xi32>
      %74 = vector.broadcast %9 : vector<1x1x128xf32> to vector<2x1x128xf32>
      %75 = vector.broadcast %65 : vector<2x1x1xf32> to vector<2x1x128xf32>
      %76 = arith.cmpf oeq, %74, %75 : vector<2x1x128xf32>
      %77 = arith.extui %76 : vector<2x1x128xi1> to vector<2x1x128xi32>
      %78 = arith.sitofp %77 : vector<2x1x128xi32> to vector<2x1x128xf32>
      %cst_44 = arith.constant dense<0.000000e+00> : vector<2x1x32xf32>
      %79 = tpu.matmul %78, %5, %cst_44 {dimension_numbers = #tpu.dot_dimension_numbers<[2], [1], [0, 1], [0], [0, 0, 0, 1, 1, 0], [], []>} : vector<2x1x128xf32>, vector<32x128xf32>, vector<2x1x32xf32> -> vector<2x1x32xf32>
      scf.yield %79, %73 : vector<2x1x32xf32>, vector<2x1x8xi32>
    }
    %c8_i32_21 = arith.constant 8 : i32
    %c0_22 = arith.constant 0 : index
    %c0_23 = arith.constant 0 : index
    %c0_24 = arith.constant 0 : index
    %19 = vector.load %arg8[%c0_22, %c0_23, %c0_24] : memref<2x1x8xi32, #tpu.memory_space<vmem>>, vector<2x1x8xi32>
    tpu.vector_store %arg8[%c0_22, %c0_23, %c0_24], %18#1 {strides = array<i32>} : memref<2x1x8xi32, #tpu.memory_space<vmem>>, vector<2x1x8xi32>,
    return
  }
}

</mosaic_0001>

<llo_original>
// kernel: generate_tokens.1
$region0: #{generate_tokens.1}
  #allocation0 [shape = 'u32[]', space=smem, size = 0x4, offset = 0x4, fixed_abs, tag = 'smem constant byte address 0x4 - core index']
  #allocation1 [shape = 'u32[144,128]{1,0:T(1,128)}', space=vmem, size = 0x12000, scoped, tag = 'internal scratch']
  #allocation2 [shape = 'f32[2,32,64]{2,1,0:T(8,128)}', space=vmem, size = 0x8000, scoped, tag = 'scratch operand']
  %s0 = inlined_call_operand.vmem [shape: f32[2,32,32], index: 0, kind: input, shape index: {}]
  %s1 = inlined_call_operand.vmem [shape: f32[32,128], index: 1, kind: input, shape index: {}]
  %s2 = inlined_call_operand.vmem [shape: f32[32,96], index: 2, kind: input, shape index: {}]
  %s3 = inlined_call_operand.vmem [shape: f32[32,32], index: 3, kind: input, shape index: {}]
  %s4 = inlined_call_operand.vmem [shape: f32[32,64], index: 4, kind: input, shape index: {}]
  %s5 = inlined_call_operand.vmem [shape: f32[64,32], index: 5, kind: input, shape index: {}]
  %s6 = inlined_call_operand.vmem [shape: f32[32,128], index: 6, kind: input, shape index: {}]
  %s7 = inlined_call_operand.vmem [shape: f32[2,1,32], index: 7, kind: input, shape index: {}]
  %s8 = inlined_call_operand.hbm [shape: s32[2,1,8], index: 8, kind: output, shape index: {}]
  %s9 = sld [smem:[#allocation0]]
  $region49: #{generate_tokens.1} parent=0
    _
  %s11 = ssub.s32 1, %s9
  %s12 = scalar_select 0, %s11, %s9
  $region1: #{generate_tokens.1} parent=0
    #allocation3 [shape = 'u8[1024]{0}', space=vmem, size = 0x400, scoped, tag = 'output window, operand 0, single buffered']
    #allocation4 [shape = 's32[1]{0}', space=sflag, size = 0x4, scoped, tag = 'scoped memory for generate_tokens.1']
    %13 = vsyncpa [#allocation4], 0
    // Predicated region
    $region2: #{generate_tokens.1} parent=1 // pred_check
      _
    $region3: #{generate_tokens.1} parent=1 // pred_check_branch
      %15 = sbr.rel (0) target = $region5
    $region4: #{generate_tokens.1} parent=1 // pred_region
      _
    $region5: #{generate_tokens.1} parent=1 // pred_fallthru
      _
    // Predicated region
    $region6: #{generate_tokens.1} parent=1 // pred_check
      _
    $region7: #{generate_tokens.1} parent=1 // pred_check_branch
      %17 = sbr.rel (0) target = $region9
    $region8: #{generate_tokens.1} parent=1 // pred_region
      _
    $region9: #{generate_tokens.1} parent=1 // pred_fallthru
      _
    // Predicated region
    $region10: #{generate_tokens.1} parent=1 // pred_check
      _
    $region11: #{generate_tokens.1} parent=1 // pred_check_branch
      %19 = sbr.rel (0) target = $region13
    $region12: #{generate_tokens.1} parent=1 // pred_region
      _
    $region13: #{generate_tokens.1} parent=1 // pred_fallthru
      _
    // Predicated region
    $region14: #{generate_tokens.1} parent=1 // pred_check
      _
    $region15: #{generate_tokens.1} parent=1 // pred_check_branch
      %21 = sbr.rel (0) target = $region17
    $region16: #{generate_tokens.1} parent=1 // pred_region
      _
    $region17: #{generate_tokens.1} parent=1 // pred_fallthru
      _
    // Predicated region
    $region18: #{generate_tokens.1} parent=1 // pred_check
      _
    $region19: #{generate_tokens.1} parent=1 // pred_check_branch
      %23 = sbr.rel (0) target = $region21
    $region20: #{generate_tokens.1} parent=1 // pred_region
      _
    $region21: #{generate_tokens.1} parent=1 // pred_fallthru
      _
    // Predicated region
    $region22: #{generate_tokens.1} parent=1 // pred_check
      _
    $region23: #{generate_tokens.1} parent=1 // pred_check_branch
      %25 = sbr.rel (0) target = $region25
    $region24: #{generate_tokens.1} parent=1 // pred_region
      _
    $region25: #{generate_tokens.1} parent=1 // pred_fallthru
      _
    // Predicated region
    $region26: #{generate_tokens.1} parent=1 // pred_check
      _
    $region27: #{generate_tokens.1} parent=1 // pred_check_branch
      %27 = sbr.rel (0) target = $region29
    $region28: #{generate_tokens.1} parent=1 // pred_region
      _
    $region29: #{generate_tokens.1} parent=1 // pred_fallthru
      _
    // Predicated region
    $region30: #{generate_tokens.1} parent=1 // pred_check
      _
    $region31: #{generate_tokens.1} parent=1 // pred_check_branch
      %29 = sbr.rel (0) target = $region33
    $region32: #{generate_tokens.1} parent=1 // pred_region
      _
    $region33: #{generate_tokens.1} parent=1 // pred_fallthru
      _
    %v30 = vld [vmem:[%s2] sm:$0xff]
    %v31 = vld [vmem:[%s2 + $0x8] sm:$0xff]
    %v32 = vld [vmem:[%s2 + $0x10] sm:$0xff]
    %v33 = vld [vmem:[%s2 + $0x18] sm:$0xff]
    %v34 = vld [vmem:[%s3] sm:$0xff]
    %v35 = vld [vmem:[%s3 + $0x8] sm:$0xff]
    %v36 = vld [vmem:[%s3 + $0x10] sm:$0xff]
    %v37 = vld [vmem:[%s3 + $0x18] sm:$0xff]
    %v38 = vld [vmem:[%s4] sm:$0xff]
    %v39 = vld [vmem:[%s4 + $0x8] sm:$0xff]
    %v40 = vld [vmem:[%s4 + $0x10] sm:$0xff]
    %v41 = vld [vmem:[%s4 + $0x18] sm:$0xff]
    %v42 = vld [vmem:[%s5] sm:$0xff]
    %v43 = vld [vmem:[%s5 + $0x8] sm:$0xff]
    %v44 = vld [vmem:[%s5 + $0x10] sm:$0xff]
    %v45 = vld [vmem:[%s5 + $0x18] sm:$0xff]
    %v46 = vld [vmem:[%s5 + $0x20] sm:$0xff]
    %v47 = vld [vmem:[%s5 + $0x28] sm:$0xff]
    %v48 = vld [vmem:[%s5 + $0x30] sm:$0xff]
    %v49 = vld [vmem:[%s5 + $0x38] sm:$0xff]
    %v50 = vld [vmem:[%s6] sm:$0xff]
    %v51 = vld [vmem:[%s6 + $0x8] sm:$0xff]
    %v52 = vld [vmem:[%s6 + $0x10] sm:$0xff]
    %v53 = vld [vmem:[%s6 + $0x18] sm:$0xff]
    %v54 = vld [vmem:[%s1] sm:$0xff]
    %v55 = vld [vmem:[%s1 + $0x8] sm:$0xff]
    %v56 = vld [vmem:[%s1 + $0x10] sm:$0xff]
    %v57 = vld [vmem:[%s1 + $0x18] sm:$0xff]
    %v58 = vld [vmem:[%s7] sm:$0x1]
    %v59 = vld [vmem:[%s7 + $0x1] sm:$0x1]
    %v60 = vlaneseq
    %v61 = vand.u32 %v60, 127
    %v62 = vcvt.s32.f32 %v61
    %v63 = vld [vmem:[%s0] sm:$0xff]
    %v64 = vld [vmem:[%s0 + $0x8] sm:$0xff]
    %v65 = vld [vmem:[%s0 + $0x10] sm:$0xff]
    %v66 = vld [vmem:[%s0 + $0x18] sm:$0xff]
    %v67 = vld [vmem:[%s0 + $0x20] sm:$0xff]
    %v68 = vld [vmem:[%s0 + $0x28] sm:$0xff]
    %v69 = vld [vmem:[%s0 + $0x30] sm:$0xff]
    %v70 = vld [vmem:[%s0 + $0x38] sm:$0xff]
    %75 = vrot.lane.b32.xlu0 %v30, 96
    %v76 = vpop.permute.xlu0 %75
    %77 = vrot.lane.b32.xlu0 %v31, 96
    %v78 = vpop.permute.xlu0 %77
    %79 = vrot.lane.b32.xlu0 %v32, 96
    %v80 = vpop.permute.xlu0 %79
    %81 = vrot.lane.b32.xlu0 %v33, 96
    %v82 = vpop.permute.xlu0 %81
    %vm87 = vcmask 261120
    %v89 = vsel %vm87, %v63, 0
    %v92 = vsel %vm87, %v64, 0
    %v95 = vsel %vm87, %v65, 0
    %v98 = vsel %vm87, %v66, 0
    %v101 = vsel %vm87, %v67, 0
    %v104 = vsel %vm87, %v68, 0
    %v107 = vsel %vm87, %v69, 0
    %v110 = vsel %vm87, %v70, 0
    %112 = vmatprep.subr.mxu0 0.0
    %113 = vmatpush1.msra.mxu0 %v76
    %114 = vmatprep.subr.mxu0 0.0
    %115 = vmatpush1.msra.mxu0 %v78
    %116 = vmatprep.subr.mxu0 0.0
    %117 = vmatpush1.msra.mxu0 %v80
    %118 = vmatprep.subr.mxu0 0.0
    %119 = vmatpush1.msra.mxu0 %v82
    %120 = vmatprep.subr.mxu0 0.0
    %121 = vmatpush1.msra.mxu0 0.0
    %122 = vmatprep.subr.mxu0 0.0
    %123 = vmatpush1.msra.mxu0 0.0
    %124 = vmatprep.subr.mxu0 0.0
    %125 = vmatpush1.msra.mxu0 0.0
    %126 = vmatprep.subr.mxu0 0.0
    %127 = vmatpush1.msra.mxu0 0.0
    %128 = vmatprep.subr.mxu0 0.0
    %129 = vmatpush1.msra.mxu0 0.0
    %130 = vmatprep.subr.mxu0 0.0
    %131 = vmatpush1.msra.mxu0 0.0
    %132 = vmatprep.subr.mxu0 0.0
    %133 = vmatpush1.msra.mxu0 0.0
    %134 = vmatprep.subr.mxu0 0.0
    %135 = vmatpush1.msra.mxu0 0.0
    %136 = vmatprep.subr.mxu0 0.0
    %137 = vmatpush1.msra.mxu0 0.0
    %138 = vmatprep.subr.mxu0 0.0
    %139 = vmatpush1.msra.mxu0 0.0
    %140 = vmatprep.subr.mxu0 0.0
    %141 = vmatpush1.msra.mxu0 0.0
    %142 = vmatprep.subr.mxu0 0.0
    %143 = vmatpush1.msra.mxu0 0.0
    %144 = vmatprep.subr.mxu0 0.0
    %145 = vmatpush1.msra.mxu0 0.0
    %146 = vmatprep.subr.mxu0 0.0
    %147 = vmatpush1.msra.mxu0 0.0
    %148 = vmatprep.subr.mxu0 0.0
    %149 = vmatpush1.msra.mxu0 0.0
    %150 = vmatprep.subr.mxu0 0.0
    %151 = vmatpush1.msra.mxu0 0.0
    %152 = vmatprep.subr.mxu0 0.0
    %153 = vmatpush1.msra.mxu0 0.0
    %154 = vmatprep.subr.mxu0 0.0
    %155 = vmatpush1.msra.mxu0 0.0
    %156 = vmatprep.subr.mxu0 0.0
    %157 = vmatpush1.msra.mxu0 0.0
    %158 = vmatprep.subr.mxu0 0.0
    %159 = vmatpush1.msra.mxu0 0.0
    %160 = vmatprep.subr.mxu0 0.0
    %161 = vmatpush1.msra.mxu0 0.0
    %162 = vmatprep.subr.mxu0 0.0
    %163 = vmatpush1.msra.mxu0 0.0
    %164 = vmatprep.subr.mxu0 0.0
    %165 = vmatpush1.msra.mxu0 0.0
    %166 = vmatprep.subr.mxu0 0.0
    %167 = vmatpush1.msra.mxu0 0.0
    %168 = vmatprep.subr.mxu0 0.0
    %169 = vmatpush1.msra.mxu0 0.0
    %170 = vmatprep.subr.mxu0 0.0
    %171 = vmatpush1.msra.mxu0 0.0
    %172 = vmatprep.subr.mxu0 0.0
    %173 = vmatpush1.msra.mxu0 0.0
    %174 = vmatprep.subr.mxu0 0.0
    %175 = vmatpush1.msra.mxu0 0.0
    %176 = vmatprep.mubr.f32.mxu0 0.0
    %177 = vmatmul.mubr.f32.gmra.mrb[0].mxu0 %v89
    %v178 = vpop.f32.mrb[0].mxu0
    %v179 = vadd.f32 0.0, %v178
    %v180 = vpop.f32.mrb[0].mxu0
    %181 = vmatprep.mubr.f32.mxu0 0.0
    %182 = vmatmul.mubr.f32.gmra.mrb[0].mxu0 %v92
    %v183 = vpop.f32.mrb[0].mxu0
    %v184 = vadd.f32 0.0, %v183
    %v185 = vpop.f32.mrb[0].mxu0
    %186 = vmatprep.mubr.f32.mxu0 0.0
    %187 = vmatmul.mubr.f32.gmra.mrb[0].mxu0 %v95
    %v188 = vpop.f32.mrb[0].mxu0
    %v189 = vadd.f32 0.0, %v188
    %v190 = vpop.f32.mrb[0].mxu0
    %191 = vmatprep.mubr.f32.mxu0 0.0
    %192 = vmatmul.mubr.f32.gmra.mrb[0].mxu0 %v98
    %v193 = vpop.f32.mrb[0].mxu0
    %v194 = vadd.f32 0.0, %v193
    %v195 = vpop.f32.mrb[0].mxu0
    %196 = vmatprep.mubr.f32.mxu0 0.0
    %197 = vmatmul.mubr.f32.gmra.mrb[0].mxu0 %v101
    %v198 = vpop.f32.mrb[0].mxu0
    %v199 = vadd.f32 0.0, %v198
    %v200 = vpop.f32.mrb[0].mxu0
    %201 = vmatprep.mubr.f32.mxu0 0.0
    %202 = vmatmul.mubr.f32.gmra.mrb[0].mxu0 %v104
    %v203 = vpop.f32.mrb[0].mxu0
    %v204 = vadd.f32 0.0, %v203
    %v205 = vpop.f32.mrb[0].mxu0
    %206 = vmatprep.mubr.f32.mxu0 0.0
    %207 = vmatmul.mubr.f32.gmra.mrb[0].mxu0 %v107
    %v208 = vpop.f32.mrb[0].mxu0
    %v209 = vadd.f32 0.0, %v208
    %v210 = vpop.f32.mrb[0].mxu0
    %211 = vmatprep.mubr.f32.mxu0 0.0
    %212 = vmatmul.mubr.f32.gmra.mrb[0].mxu0 %v110
    %v213 = vpop.f32.mrb[0].mxu0
    %v214 = vadd.f32 0.0, %v213
    %v215 = vpop.f32.mrb[0].mxu0
    %216 = vdwg.mxu0
    %vm217 = vcmask 523264
    %218 = vst.msk [vmem:[#allocation2] sm:$0xff] %vm217, %v179
    %219 = vst.msk [vmem:[#allocation2 + $0x8] sm:$0xff] %vm217, %v184
    %220 = vst.msk [vmem:[#allocation2 + $0x10] sm:$0xff] %vm217, %v189
    %221 = vst.msk [vmem:[#allocation2 + $0x18] sm:$0xff] %vm217, %v194
    %222 = vst.msk [vmem:[#allocation2 + $0x20] sm:$0xff] %vm217, %v199
    %223 = vst.msk [vmem:[#allocation2 + $0x28] sm:$0xff] %vm217, %v204
    %224 = vst.msk [vmem:[#allocation2 + $0x30] sm:$0xff] %vm217, %v209
    %225 = vst.msk [vmem:[#allocation2 + $0x38] sm:$0xff] %vm217, %v214
    %v226 = vrot.slane %v65, 6
    %v227 = vrot.slane %v69, 6
    loop: start=0, step=1, limit=8
    $region34: #{generate_tokens.1} parent=1 // loop_pre_header
      _
    $region35: #{generate_tokens.1} parent=1 // loop_header
      %s231 = sphi 0, %s235
      %p232 = scmp.ge.s32.totalorder %s231, 8
      %v236 = vphi %v226, %v1278
      %v237 = vphi %v227, %v1285
      %v238 = vphi 0, %v1180
      %v239 = vphi 0, %v1181
    $region36: #{generate_tokens.1} parent=1 // loop_header_branch
      %234 = sbr.rel (%p232) target = $region40
    $region37: #{generate_tokens.1} parent=1 // loop_body
      %s240 = sadd.s32 %s231, 22
      %v243 = vrot.slane %v237, 7
      %vm244 = vcmask 1041409
      %v245 = vsel %vm244, %v243, %v236
      %v246 = vsel %vm87, %v245, 0
      %248 = vmatprep.subr.mxu0 0.0
      %249 = vmatpush1.msra.mxu0 %v30
      %250 = vmatprep.subr.mxu0 0.0
      %251 = vmatpush1.msra.mxu0 %v31
      %252 = vmatprep.subr.mxu0 0.0
      %253 = vmatpush1.msra.mxu0 %v32
      %254 = vmatprep.subr.mxu0 0.0
      %255 = vmatpush1.msra.mxu0 %v33
      %256 = vmatprep.subr.mxu0 0.0
      %257 = vmatpush1.msra.mxu0 0.0
      %258 = vmatprep.subr.mxu0 0.0
      %259 = vmatpush1.msra.mxu0 0.0
      %260 = vmatprep.subr.mxu0 0.0
      %261 = vmatpush1.msra.mxu0 0.0
      %262 = vmatprep.subr.mxu0 0.0
      %263 = vmatpush1.msra.mxu0 0.0
      %264 = vmatprep.subr.mxu0 0.0
      %265 = vmatpush1.msra.mxu0 0.0
      %266 = vmatprep.subr.mxu0 0.0
      %267 = vmatpush1.msra.mxu0 0.0
      %268 = vmatprep.subr.mxu0 0.0
      %269 = vmatpush1.msra.mxu0 0.0
      %270 = vmatprep.subr.mxu0 0.0
      %271 = vmatpush1.msra.mxu0 0.0
      %272 = vmatprep.subr.mxu0 0.0
      %273 = vmatpush1.msra.mxu0 0.0
      %274 = vmatprep.subr.mxu0 0.0
      %275 = vmatpush1.msra.mxu0 0.0
      %276 = vmatprep.subr.mxu0 0.0
      %277 = vmatpush1.msra.mxu0 0.0
      %278 = vmatprep.subr.mxu0 0.0
      %279 = vmatpush1.msra.mxu0 0.0
      %280 = vmatprep.subr.mxu0 0.0
      %281 = vmatpush1.msra.mxu0 0.0
      %282 = vmatprep.subr.mxu0 0.0
      %283 = vmatpush1.msra.mxu0 0.0
      %284 = vmatprep.subr.mxu0 0.0
      %285 = vmatpush1.msra.mxu0 0.0
      %286 = vmatprep.subr.mxu0 0.0
      %287 = vmatpush1.msra.mxu0 0.0
      %288 = vmatprep.subr.mxu0 0.0
      %289 = vmatpush1.msra.mxu0 0.0
      %290 = vmatprep.subr.mxu0 0.0
      %291 = vmatpush1.msra.mxu0 0.0
      %292 = vmatprep.subr.mxu0 0.0
      %293 = vmatpush1.msra.mxu0 0.0
      %294 = vmatprep.subr.mxu0 0.0
      %295 = vmatpush1.msra.mxu0 0.0
      %296 = vmatprep.subr.mxu0 0.0
      %297 = vmatpush1.msra.mxu0 0.0
      %298 = vmatprep.subr.mxu0 0.0
      %299 = vmatpush1.msra.mxu0 0.0
      %300 = vmatprep.subr.mxu0 0.0
      %301 = vmatpush1.msra.mxu0 0.0
      %302 = vmatprep.subr.mxu0 0.0
      %303 = vmatpush1.msra.mxu0 0.0
      %304 = vmatprep.subr.mxu0 0.0
      %305 = vmatpush1.msra.mxu0 0.0
      %306 = vmatprep.subr.mxu0 0.0
      %307 = vmatpush1.msra.mxu0 0.0
      %308 = vmatprep.subr.mxu0 0.0
      %309 = vmatpush1.msra.mxu0 0.0
      %310 = vmatprep.subr.mxu0 0.0
      %311 = vmatpush1.msra.mxu0 0.0
      %312 = vmatprep.mubr.f32.mxu0 0.0
      %313 = vmatmul.mubr.f32.gmra.mrb[0].mxu0 %v246
      %v314 = vpop.f32.mrb[0].mxu0
      %v315 = vadd.f32 0.0, %v314
      %v316 = vpop.f32.mrb[0].mxu0
      %317 = vdwg.mxu0
      %v320 = vunpack.c.l.s4 1966171168
      %v321 = vunpack.c.0.s8 %v320
      %v322 = vlaneseq
      %v323 = vshrl.u32 %v322, 7
      %v324 = vsub.s32 %v321, %v323
      %v325 = vrot.slane %v315, %v324
      %v326 = vcombine.high %v325, %v325
      %v328 = vunpack.c.l.s4 1966171168
      %v329 = vunpack.c.0.s8 %v328
      %v330 = vlaneseq
      %v331 = vshrl.u32 %v330, 7
      %v332 = vsub.s32 %v329, %v331
      %v333 = vrot.slane %v325, %v332
      %v335 = vunpack.c.l.s4 1966171168
      %v336 = vunpack.c.0.s8 %v335
      %v337 = vlaneseq
      %v338 = vshrl.u32 %v337, 7
      %v339 = vsub.s32 %v336, %v338
      %v340 = vrot.slane %v326, %v339
      %v341 = vlaneseq
      %v342 = vshrl.u32 %v341, 7
      %v343 = vsub.s32 0, %v342
      %v344 = vrot.slane %v333, %v343
      %v345 = vlaneseq
      %v346 = vshrl.u32 %v345, 7
      %v347 = vsub.s32 0, %v346
      %v348 = vrot.slane %v340, %v347
      %349 = vrot.lane.b32.xlu0 %v344, 96
      %v350 = vpop.permute.xlu0 %349
      %351 = vrot.lane.b32.xlu0 %v348, 96
      %v352 = vpop.permute.xlu0 %351
      %s355 = scalar_lea.vmem [#allocation2], %s240
      %vm356 = vcmask 516096
      %357 = vst.msk [vmem:[%s355] sm:$0x1] %vm356, %v350
      %358 = vst.msk [vmem:[%s355 + $0x20] sm:$0x1] %vm356, %v352
      %v359 = vld [vmem:[#allocation2] sm:$0xff]
      %v360 = vld [vmem:[#allocation2 + $0x8] sm:$0xff]
      %v361 = vld [vmem:[#allocation2 + $0x10] sm:$0xff]
      %v362 = vld [vmem:[#allocation2 + $0x18] sm:$0xff]
      %v363 = vld [vmem:[#allocation2 + $0x20] sm:$0xff]
      %v364 = vld [vmem:[#allocation2 + $0x28] sm:$0xff]
      %v365 = vld [vmem:[#allocation2 + $0x30] sm:$0xff]
      %v366 = vld [vmem:[#allocation2 + $0x38] sm:$0xff]
      %v367 = vstv %s240
      %vm368 = vcmp.le.s32.totalorder %v61, %v367
      %v369 = vsel %vm87, %v333, 0
      %v372 = vsel %vm87, %v359, 0
      %v375 = vsel %vm87, %v360, 0
      %v378 = vsel %vm87, %v361, 0
      %v381 = vsel %vm87, %v362, 0
      %383 = vmatprep.subr.mxu0 0.0
      %384 = vmatpush1.xpose.msra.mxu0 %v372
      %385 = vmatprep.subr.mxu0 0.0
      %386 = vmatpush1.xpose.msra.mxu0 %v375
      %387 = vmatprep.subr.mxu0 0.0
      %388 = vmatpush1.xpose.msra.mxu0 %v378
      %389 = vmatprep.subr.mxu0 0.0
      %390 = vmatpush1.xpose.msra.mxu0 %v381
      %391 = vmatprep.subr.mxu0 0.0
      %392 = vmatpush1.xpose.msra.mxu0 0.0
      %393 = vmatprep.subr.mxu0 0.0
      %394 = vmatpush1.xpose.msra.mxu0 0.0
      %395 = vmatprep.subr.mxu0 0.0
      %396 = vmatpush1.xpose.msra.mxu0 0.0
      %397 = vmatprep.subr.mxu0 0.0
      %398 = vmatpush1.xpose.msra.mxu0 0.0
      %399 = vmatprep.subr.mxu0 0.0
      %400 = vmatpush1.xpose.msra.mxu0 0.0
      %401 = vmatprep.subr.mxu0 0.0
      %402 = vmatpush1.xpose.msra.mxu0 0.0
      %403 = vmatprep.subr.mxu0 0.0
      %404 = vmatpush1.xpose.msra.mxu0 0.0
      %405 = vmatprep.subr.mxu0 0.0
      %406 = vmatpush1.xpose.msra.mxu0 0.0
      %407 = vmatprep.subr.mxu0 0.0
      %408 = vmatpush1.xpose.msra.mxu0 0.0
      %409 = vmatprep.subr.mxu0 0.0
      %410 = vmatpush1.xpose.msra.mxu0 0.0
      %411 = vmatprep.subr.mxu0 0.0
      %412 = vmatpush1.xpose.msra.mxu0 0.0
      %413 = vmatprep.subr.mxu0 0.0
      %414 = vmatpush1.xpose.msra.mxu0 0.0
      %415 = vmatprep.subr.mxu0 0.0
      %416 = vmatpush1.xpose.msra.mxu0 0.0
      %417 = vmatprep.subr.mxu0 0.0
      %418 = vmatpush1.xpose.msra.mxu0 0.0
      %419 = vmatprep.subr.mxu0 0.0
      %420 = vmatpush1.xpose.msra.mxu0 0.0
      %421 = vmatprep.subr.mxu0 0.0
      %422 = vmatpush1.xpose.msra.mxu0 0.0
      %423 = vmatprep.subr.mxu0 0.0
      %424 = vmatpush1.xpose.msra.mxu0 0.0
      %425 = vmatprep.subr.mxu0 0.0
      %426 = vmatpush1.xpose.msra.mxu0 0.0
      %427 = vmatprep.subr.mxu0 0.0
      %428 = vmatpush1.xpose.msra.mxu0 0.0
      %429 = vmatprep.subr.mxu0 0.0
      %430 = vmatpush1.xpose.msra.mxu0 0.0
      %431 = vmatprep.subr.mxu0 0.0
      %432 = vmatpush1.xpose.msra.mxu0 0.0
      %433 = vmatprep.subr.mxu0 0.0
      %434 = vmatpush1.xpose.msra.mxu0 0.0
      %435 = vmatprep.subr.mxu0 0.0
      %436 = vmatpush1.xpose.msra.mxu0 0.0
      %437 = vmatprep.subr.mxu0 0.0
      %438 = vmatpush1.xpose.msra.mxu0 0.0
      %439 = vmatprep.subr.mxu0 0.0
      %440 = vmatpush1.xpose.msra.mxu0 0.0
      %441 = vmatprep.subr.mxu0 0.0
      %442 = vmatpush1.xpose.msra.mxu0 0.0
      %443 = vmatprep.subr.mxu0 0.0
      %444 = vmatpush1.xpose.msra.mxu0 0.0
      %445 = vmatprep.subr.mxu0 0.0
      %446 = vmatpush1.xpose.msra.mxu0 0.0
      %447 = vmatprep.mubr.f32.mxu0 0.0
      %448 = vmatmul.mubr.f32.gmra.mrb[0].mxu0 %v369
      %v449 = vpop.f32.mrb[0].mxu0
      %v450 = vadd.f32 %v58, %v449
      %v451 = vpop.f32.mrb[0].mxu0
      %452 = vdwg.mxu0
      %v453 = vsel %vm87, %v340, 0
      %v456 = vsel %vm87, %v363, 0
      %v459 = vsel %vm87, %v364, 0
      %v462 = vsel %vm87, %v365, 0
      %v465 = vsel %vm87, %v366, 0
      %467 = vmatprep.subr.mxu0 0.0
      %468 = vmatpush1.xpose.msra.mxu0 %v456
      %469 = vmatprep.subr.mxu0 0.0
      %470 = vmatpush1.xpose.msra.mxu0 %v459
      %471 = vmatprep.subr.mxu0 0.0
      %472 = vmatpush1.xpose.msra.mxu0 %v462
      %473 = vmatprep.subr.mxu0 0.0
      %474 = vmatpush1.xpose.msra.mxu0 %v465
      %475 = vmatprep.subr.mxu0 0.0
      %476 = vmatpush1.xpose.msra.mxu0 0.0
      %477 = vmatprep.subr.mxu0 0.0
      %478 = vmatpush1.xpose.msra.mxu0 0.0
      %479 = vmatprep.subr.mxu0 0.0
      %480 = vmatpush1.xpose.msra.mxu0 0.0
      %481 = vmatprep.subr.mxu0 0.0
      %482 = vmatpush1.xpose.msra.mxu0 0.0
      %483 = vmatprep.subr.mxu0 0.0
      %484 = vmatpush1.xpose.msra.mxu0 0.0
      %485 = vmatprep.subr.mxu0 0.0
      %486 = vmatpush1.xpose.msra.mxu0 0.0
      %487 = vmatprep.subr.mxu0 0.0
      %488 = vmatpush1.xpose.msra.mxu0 0.0
      %489 = vmatprep.subr.mxu0 0.0
      %490 = vmatpush1.xpose.msra.mxu0 0.0
      %491 = vmatprep.subr.mxu0 0.0
      %492 = vmatpush1.xpose.msra.mxu0 0.0
      %493 = vmatprep.subr.mxu0 0.0
      %494 = vmatpush1.xpose.msra.mxu0 0.0
      %495 = vmatprep.subr.mxu0 0.0
      %496 = vmatpush1.xpose.msra.mxu0 0.0
      %497 = vmatprep.subr.mxu0 0.0
      %498 = vmatpush1.xpose.msra.mxu0 0.0
      %499 = vmatprep.subr.mxu0 0.0
      %500 = vmatpush1.xpose.msra.mxu0 0.0
      %501 = vmatprep.subr.mxu0 0.0
      %502 = vmatpush1.xpose.msra.mxu0 0.0
      %503 = vmatprep.subr.mxu0 0.0
      %504 = vmatpush1.xpose.msra.mxu0 0.0
      %505 = vmatprep.subr.mxu0 0.0
      %506 = vmatpush1.xpose.msra.mxu0 0.0
      %507 = vmatprep.subr.mxu0 0.0
      %508 = vmatpush1.xpose.msra.mxu0 0.0
      %509 = vmatprep.subr.mxu0 0.0
      %510 = vmatpush1.xpose.msra.mxu0 0.0
      %511 = vmatprep.subr.mxu0 0.0
      %512 = vmatpush1.xpose.msra.mxu0 0.0
      %513 = vmatprep.subr.mxu0 0.0
      %514 = vmatpush1.xpose.msra.mxu0 0.0
      %515 = vmatprep.subr.mxu0 0.0
      %516 = vmatpush1.xpose.msra.mxu0 0.0
      %517 = vmatprep.subr.mxu0 0.0
      %518 = vmatpush1.xpose.msra.mxu0 0.0
      %519 = vmatprep.subr.mxu0 0.0
      %520 = vmatpush1.xpose.msra.mxu0 0.0
      %521 = vmatprep.subr.mxu0 0.0
      %522 = vmatpush1.xpose.msra.mxu0 0.0
      %523 = vmatprep.subr.mxu0 0.0
      %524 = vmatpush1.xpose.msra.mxu0 0.0
      %525 = vmatprep.subr.mxu0 0.0
      %526 = vmatpush1.xpose.msra.mxu0 0.0
      %527 = vmatprep.subr.mxu0 0.0
      %528 = vmatpush1.xpose.msra.mxu0 0.0
      %529 = vmatprep.subr.mxu0 0.0
      %530 = vmatpush1.xpose.msra.mxu0 0.0
      %531 = vmatprep.mubr.f32.mxu0 0.0
      %532 = vmatmul.mubr.f32.gmra.mrb[0].mxu0 %v453
      %v533 = vpop.f32.mrb[0].mxu0
      %v534 = vadd.f32 %v59, %v533
      %v535 = vpop.f32.mrb[0].mxu0
      %536 = vdwg.mxu0
      %v537 = vsel %vm368, 1, 0
      %vm538 = vcmp.eq.s32.totalorder %v537, 1
      %v539 = vsel %vm538, %v450, -1e+30
      %v540 = vsel %vm538, %v534, -1e+30
      %vm541 = vcmask 253952
      %v542 = vsel %vm541, %v539, -inf
      %543 = vmax.xlane.f32.xlu0 %v542
      %v544 = vpop.xlane.xlu0 %543
      %v545 = vsel %vm541, %v540, -inf
      %546 = vmax.xlane.f32.xlu0 %v545
      %v547 = vpop.xlane.xlu0 %546
      %v548 = vsub.f32 %v539, %v544
      %v549 = vsub.f32 %v540, %v547
      %v550 = vmul.f32 %v548, 1.442695
      %v551 = vpow.pop %v550
      %v552 = vmul.f32 %v549, 1.442695
      %v553 = vpow.pop %v552
      %v554 = vsel %vm541, %v551, 0.0
      %555 = vadd.xlane.f32.xlu0 %v554
      %v556 = vpop.xlane.xlu0 %555
      %v557 = vsel %vm541, %v553, 0.0
      %558 = vadd.xlane.f32.xlu0 %v557
      %v559 = vpop.xlane.xlu0 %558
      %v560 = vrcp.pop %v556
      %v561 = vrcp.pop %v559
      %v562 = vmul.f32 %v551, %v560
      %v563 = vmul.f32 %v553, %v561
      %564 = vrot.lane.b32.xlu0 %v359, 96
      %v565 = vpop.permute.xlu0 %564
      %566 = vrot.lane.b32.xlu0 %v360, 96
      %v567 = vpop.permute.xlu0 %566
      %568 = vrot.lane.b32.xlu0 %v361, 96
      %v569 = vpop.permute.xlu0 %568
      %570 = vrot.lane.b32.xlu0 %v362, 96
      %v571 = vpop.permute.xlu0 %570
      %v577 = vsel %vm87, %v562, 0
      %579 = vmatprep.subr.mxu0 0.0
      %580 = vmatpush1.msra.mxu0 %v565
      %581 = vmatprep.subr.mxu0 0.0
      %582 = vmatpush1.msra.mxu0 %v567
      %583 = vmatprep.subr.mxu0 0.0
      %584 = vmatpush1.msra.mxu0 %v569
      %585 = vmatprep.subr.mxu0 0.0
      %586 = vmatpush1.msra.mxu0 %v571
      %587 = vmatprep.subr.mxu0 0.0
      %588 = vmatpush1.msra.mxu0 0.0
      %589 = vmatprep.subr.mxu0 0.0
      %590 = vmatpush1.msra.mxu0 0.0
      %591 = vmatprep.subr.mxu0 0.0
      %592 = vmatpush1.msra.mxu0 0.0
      %593 = vmatprep.subr.mxu0 0.0
      %594 = vmatpush1.msra.mxu0 0.0
      %595 = vmatprep.subr.mxu0 0.0
      %596 = vmatpush1.msra.mxu0 0.0
      %597 = vmatprep.subr.mxu0 0.0
      %598 = vmatpush1.msra.mxu0 0.0
      %599 = vmatprep.subr.mxu0 0.0
      %600 = vmatpush1.msra.mxu0 0.0
      %601 = vmatprep.subr.mxu0 0.0
      %602 = vmatpush1.msra.mxu0 0.0
      %603 = vmatprep.subr.mxu0 0.0
      %604 = vmatpush1.msra.mxu0 0.0
      %605 = vmatprep.subr.mxu0 0.0
      %606 = vmatpush1.msra.mxu0 0.0
      %607 = vmatprep.subr.mxu0 0.0
      %608 = vmatpush1.msra.mxu0 0.0
      %609 = vmatprep.subr.mxu0 0.0
      %610 = vmatpush1.msra.mxu0 0.0
      %611 = vmatprep.subr.mxu0 0.0
      %612 = vmatpush1.msra.mxu0 0.0
      %613 = vmatprep.subr.mxu0 0.0
      %614 = vmatpush1.msra.mxu0 0.0
      %615 = vmatprep.subr.mxu0 0.0
      %616 = vmatpush1.msra.mxu0 0.0
      %617 = vmatprep.subr.mxu0 0.0
      %618 = vmatpush1.msra.mxu0 0.0
      %619 = vmatprep.subr.mxu0 0.0
      %620 = vmatpush1.msra.mxu0 0.0
      %621 = vmatprep.subr.mxu0 0.0
      %622 = vmatpush1.msra.mxu0 0.0
      %623 = vmatprep.subr.mxu0 0.0
      %624 = vmatpush1.msra.mxu0 0.0
      %625 = vmatprep.subr.mxu0 0.0
      %626 = vmatpush1.msra.mxu0 0.0
      %627 = vmatprep.subr.mxu0 0.0
      %628 = vmatpush1.msra.mxu0 0.0
      %629 = vmatprep.subr.mxu0 0.0
      %630 = vmatpush1.msra.mxu0 0.0
      %631 = vmatprep.subr.mxu0 0.0
      %632 = vmatpush1.msra.mxu0 0.0
      %633 = vmatprep.subr.mxu0 0.0
      %634 = vmatpush1.msra.mxu0 0.0
      %635 = vmatprep.subr.mxu0 0.0
      %636 = vmatpush1.msra.mxu0 0.0
      %637 = vmatprep.subr.mxu0 0.0
      %638 = vmatpush1.msra.mxu0 0.0
      %639 = vmatprep.subr.mxu0 0.0
      %640 = vmatpush1.msra.mxu0 0.0
      %641 = vmatprep.subr.mxu0 0.0
      %642 = vmatpush1.msra.mxu0 0.0
      %643 = vmatprep.mubr.f32.mxu0 0.0
      %644 = vmatmul.mubr.f32.gmra.mrb[0].mxu0 %v577
      %v645 = vpop.f32.mrb[0].mxu0
      %v646 = vadd.f32 0.0, %v645
      %v647 = vpop.f32.mrb[0].mxu0
      %648 = vdwg.mxu0
      %649 = vrot.lane.b32.xlu0 %v363, 96
      %v650 = vpop.permute.xlu0 %649
      %651 = vrot.lane.b32.xlu0 %v364, 96
      %v652 = vpop.permute.xlu0 %651
      %653 = vrot.lane.b32.xlu0 %v365, 96
      %v654 = vpop.permute.xlu0 %653
      %655 = vrot.lane.b32.xlu0 %v366, 96
      %v656 = vpop.permute.xlu0 %655
      %v662 = vsel %vm87, %v563, 0
      %664 = vmatprep.subr.mxu0 0.0
      %665 = vmatpush1.msra.mxu0 %v650
      %666 = vmatprep.subr.mxu0 0.0
      %667 = vmatpush1.msra.mxu0 %v652
      %668 = vmatprep.subr.mxu0 0.0
      %669 = vmatpush1.msra.mxu0 %v654
      %670 = vmatprep.subr.mxu0 0.0
      %671 = vmatpush1.msra.mxu0 %v656
      %672 = vmatprep.subr.mxu0 0.0
      %673 = vmatpush1.msra.mxu0 0.0
      %674 = vmatprep.subr.mxu0 0.0
      %675 = vmatpush1.msra.mxu0 0.0
      %676 = vmatprep.subr.mxu0 0.0
      %677 = vmatpush1.msra.mxu0 0.0
      %678 = vmatprep.subr.mxu0 0.0
      %679 = vmatpush1.msra.mxu0 0.0
      %680 = vmatprep.subr.mxu0 0.0
      %681 = vmatpush1.msra.mxu0 0.0
      %682 = vmatprep.subr.mxu0 0.0
      %683 = vmatpush1.msra.mxu0 0.0
      %684 = vmatprep.subr.mxu0 0.0
      %685 = vmatpush1.msra.mxu0 0.0
      %686 = vmatprep.subr.mxu0 0.0
      %687 = vmatpush1.msra.mxu0 0.0
      %688 = vmatprep.subr.mxu0 0.0
      %689 = vmatpush1.msra.mxu0 0.0
      %690 = vmatprep.subr.mxu0 0.0
      %691 = vmatpush1.msra.mxu0 0.0
      %692 = vmatprep.subr.mxu0 0.0
      %693 = vmatpush1.msra.mxu0 0.0
      %694 = vmatprep.subr.mxu0 0.0
      %695 = vmatpush1.msra.mxu0 0.0
      %696 = vmatprep.subr.mxu0 0.0
      %697 = vmatpush1.msra.mxu0 0.0
      %698 = vmatprep.subr.mxu0 0.0
      %699 = vmatpush1.msra.mxu0 0.0
      %700 = vmatprep.subr.mxu0 0.0
      %701 = vmatpush1.msra.mxu0 0.0
      %702 = vmatprep.subr.mxu0 0.0
      %703 = vmatpush1.msra.mxu0 0.0
      %704 = vmatprep.subr.mxu0 0.0
      %705 = vmatpush1.msra.mxu0 0.0
      %706 = vmatprep.subr.mxu0 0.0
      %707 = vmatpush1.msra.mxu0 0.0
      %708 = vmatprep.subr.mxu0 0.0
      %709 = vmatpush1.msra.mxu0 0.0
      %710 = vmatprep.subr.mxu0 0.0
      %711 = vmatpush1.msra.mxu0 0.0
      %712 = vmatprep.subr.mxu0 0.0
      %713 = vmatpush1.msra.mxu0 0.0
      %714 = vmatprep.subr.mxu0 0.0
      %715 = vmatpush1.msra.mxu0 0.0
      %716 = vmatprep.subr.mxu0 0.0
      %717 = vmatpush1.msra.mxu0 0.0
      %718 = vmatprep.subr.mxu0 0.0
      %719 = vmatpush1.msra.mxu0 0.0
      %720 = vmatprep.subr.mxu0 0.0
      %721 = vmatpush1.msra.mxu0 0.0
      %722 = vmatprep.subr.mxu0 0.0
      %723 = vmatpush1.msra.mxu0 0.0
      %724 = vmatprep.subr.mxu0 0.0
      %725 = vmatpush1.msra.mxu0 0.0
      %726 = vmatprep.subr.mxu0 0.0
      %727 = vmatpush1.msra.mxu0 0.0
      %728 = vmatprep.mubr.f32.mxu0 0.0
      %729 = vmatmul.mubr.f32.gmra.mrb[0].mxu0 %v662
      %v730 = vpop.f32.mrb[0].mxu0
      %v731 = vadd.f32 0.0, %v730
      %v732 = vpop.f32.mrb[0].mxu0
      %733 = vdwg.mxu0
      %v736 = vrot.slane %v731, 7
      %v737 = vsel %vm244, %v736, %v646
      %v738 = vsel %vm87, %v737, 0
      %740 = vmatprep.subr.mxu0 0.0
      %741 = vmatpush1.msra.mxu0 %v34
      %742 = vmatprep.subr.mxu0 0.0
      %743 = vmatpush1.msra.mxu0 %v35
      %744 = vmatprep.subr.mxu0 0.0
      %745 = vmatpush1.msra.mxu0 %v36
      %746 = vmatprep.subr.mxu0 0.0
      %747 = vmatpush1.msra.mxu0 %v37
      %748 = vmatprep.subr.mxu0 0.0
      %749 = vmatpush1.msra.mxu0 0.0
      %750 = vmatprep.subr.mxu0 0.0
      %751 = vmatpush1.msra.mxu0 0.0
      %752 = vmatprep.subr.mxu0 0.0
      %753 = vmatpush1.msra.mxu0 0.0
      %754 = vmatprep.subr.mxu0 0.0
      %755 = vmatpush1.msra.mxu0 0.0
      %756 = vmatprep.subr.mxu0 0.0
      %757 = vmatpush1.msra.mxu0 0.0
      %758 = vmatprep.subr.mxu0 0.0
      %759 = vmatpush1.msra.mxu0 0.0
      %760 = vmatprep.subr.mxu0 0.0
      %761 = vmatpush1.msra.mxu0 0.0
      %762 = vmatprep.subr.mxu0 0.0
      %763 = vmatpush1.msra.mxu0 0.0
      %764 = vmatprep.subr.mxu0 0.0
      %765 = vmatpush1.msra.mxu0 0.0
      %766 = vmatprep.subr.mxu0 0.0
      %767 = vmatpush1.msra.mxu0 0.0
      %768 = vmatprep.subr.mxu0 0.0
      %769 = vmatpush1.msra.mxu0 0.0
      %770 = vmatprep.subr.mxu0 0.0
      %771 = vmatpush1.msra.mxu0 0.0
      %772 = vmatprep.subr.mxu0 0.0
      %773 = vmatpush1.msra.mxu0 0.0
      %774 = vmatprep.subr.mxu0 0.0
      %775 = vmatpush1.msra.mxu0 0.0
      %776 = vmatprep.subr.mxu0 0.0
      %777 = vmatpush1.msra.mxu0 0.0
      %778 = vmatprep.subr.mxu0 0.0
      %779 = vmatpush1.msra.mxu0 0.0
      %780 = vmatprep.subr.mxu0 0.0
      %781 = vmatpush1.msra.mxu0 0.0
      %782 = vmatprep.subr.mxu0 0.0
      %783 = vmatpush1.msra.mxu0 0.0
      %784 = vmatprep.subr.mxu0 0.0
      %785 = vmatpush1.msra.mxu0 0.0
      %786 = vmatprep.subr.mxu0 0.0
      %787 = vmatpush1.msra.mxu0 0.0
      %788 = vmatprep.subr.mxu0 0.0
      %789 = vmatpush1.msra.mxu0 0.0
      %790 = vmatprep.subr.mxu0 0.0
      %791 = vmatpush1.msra.mxu0 0.0
      %792 = vmatprep.subr.mxu0 0.0
      %793 = vmatpush1.msra.mxu0 0.0
      %794 = vmatprep.subr.mxu0 0.0
      %795 = vmatpush1.msra.mxu0 0.0
      %796 = vmatprep.subr.mxu0 0.0
      %797 = vmatpush1.msra.mxu0 0.0
      %798 = vmatprep.subr.mxu0 0.0
      %799 = vmatpush1.msra.mxu0 0.0
      %800 = vmatprep.subr.mxu0 0.0
      %801 = vmatpush1.msra.mxu0 0.0
      %802 = vmatprep.subr.mxu0 0.0
      %803 = vmatpush1.msra.mxu0 0.0
      %804 = vmatprep.mubr.f32.mxu0 0.0
      %805 = vmatmul.mubr.f32.gmra.mrb[0].mxu0 %v738
      %v806 = vpop.f32.mrb[0].mxu0
      %v807 = vadd.f32 0.0, %v806
      %v808 = vpop.f32.mrb[0].mxu0
      %809 = vdwg.mxu0
      %v812 = vunpack.c.l.s4 1966171168
      %v813 = vunpack.c.0.s8 %v812
      %v814 = vlaneseq
      %v815 = vshrl.u32 %v814, 7
      %v816 = vsub.s32 %v813, %v815
      %v817 = vrot.slane %v807, %v816
      %v818 = vcombine.high %v817, %v817
      %v820 = vunpack.c.l.s4 1966171168
      %v821 = vunpack.c.0.s8 %v820
      %v822 = vlaneseq
      %v823 = vshrl.u32 %v822, 7
      %v824 = vsub.s32 %v821, %v823
      %v825 = vrot.slane %v817, %v824
      %v827 = vunpack.c.l.s4 1966171168
      %v828 = vunpack.c.0.s8 %v827
      %v829 = vlaneseq
      %v830 = vshrl.u32 %v829, 7
      %v831 = vsub.s32 %v828, %v830
      %v832 = vrot.slane %v818, %v831
      %v835 = vadd.f32 %v236, %v825
      %v836 = vadd.f32 %v237, %v832
      %v839 = vrot.slane %v836, 7
      %v840 = vsel %vm244, %v839, %v835
      %v841 = vsel %vm87, %v840, 0
      %843 = vmatprep.subr.mxu0 0.0
      %844 = vmatpush1.msra.mxu0 %v38
      %845 = vmatprep.subr.mxu0 0.0
      %846 = vmatpush1.msra.mxu0 %v39
      %847 = vmatprep.subr.mxu0 0.0
      %848 = vmatpush1.msra.mxu0 %v40
      %849 = vmatprep.subr.mxu0 0.0
      %850 = vmatpush1.msra.mxu0 %v41
      %851 = vmatprep.subr.mxu0 0.0
      %852 = vmatpush1.msra.mxu0 0.0
      %853 = vmatprep.subr.mxu0 0.0
      %854 = vmatpush1.msra.mxu0 0.0
      %855 = vmatprep.subr.mxu0 0.0
      %856 = vmatpush1.msra.mxu0 0.0
      %857 = vmatprep.subr.mxu0 0.0
      %858 = vmatpush1.msra.mxu0 0.0
      %859 = vmatprep.subr.mxu0 0.0
      %860 = vmatpush1.msra.mxu0 0.0
      %861 = vmatprep.subr.mxu0 0.0
      %862 = vmatpush1.msra.mxu0 0.0
      %863 = vmatprep.subr.mxu0 0.0
      %864 = vmatpush1.msra.mxu0 0.0
      %865 = vmatprep.subr.mxu0 0.0
      %866 = vmatpush1.msra.mxu0 0.0
      %867 = vmatprep.subr.mxu0 0.0
      %868 = vmatpush1.msra.mxu0 0.0
      %869 = vmatprep.subr.mxu0 0.0
      %870 = vmatpush1.msra.mxu0 0.0
      %871 = vmatprep.subr.mxu0 0.0
      %872 = vmatpush1.msra.mxu0 0.0
      %873 = vmatprep.subr.mxu0 0.0
      %874 = vmatpush1.msra.mxu0 0.0
      %875 = vmatprep.subr.mxu0 0.0
      %876 = vmatpush1.msra.mxu0 0.0
      %877 = vmatprep.subr.mxu0 0.0
      %878 = vmatpush1.msra.mxu0 0.0
      %879 = vmatprep.subr.mxu0 0.0
      %880 = vmatpush1.msra.mxu0 0.0
      %881 = vmatprep.subr.mxu0 0.0
      %882 = vmatpush1.msra.mxu0 0.0
      %883 = vmatprep.subr.mxu0 0.0
      %884 = vmatpush1.msra.mxu0 0.0
      %885 = vmatprep.subr.mxu0 0.0
      %886 = vmatpush1.msra.mxu0 0.0
      %887 = vmatprep.subr.mxu0 0.0
      %888 = vmatpush1.msra.mxu0 0.0
      %889 = vmatprep.subr.mxu0 0.0
      %890 = vmatpush1.msra.mxu0 0.0
      %891 = vmatprep.subr.mxu0 0.0
      %892 = vmatpush1.msra.mxu0 0.0
      %893 = vmatprep.subr.mxu0 0.0
      %894 = vmatpush1.msra.mxu0 0.0
      %895 = vmatprep.subr.mxu0 0.0
      %896 = vmatpush1.msra.mxu0 0.0
      %897 = vmatprep.subr.mxu0 0.0
      %898 = vmatpush1.msra.mxu0 0.0
      %899 = vmatprep.subr.mxu0 0.0
      %900 = vmatpush1.msra.mxu0 0.0
      %901 = vmatprep.subr.mxu0 0.0
      %902 = vmatpush1.msra.mxu0 0.0
      %903 = vmatprep.subr.mxu0 0.0
      %904 = vmatpush1.msra.mxu0 0.0
      %905 = vmatprep.subr.mxu0 0.0
      %906 = vmatpush1.msra.mxu0 0.0
      %907 = vmatprep.mubr.f32.mxu0 0.0
      %908 = vmatmul.mubr.f32.gmra.mrb[0].mxu0 %v841
      %v909 = vpop.f32.mrb[0].mxu0
      %v910 = vadd.f32 0.0, %v909
      %v911 = vpop.f32.mrb[0].mxu0
      %912 = vdwg.mxu0
      %v915 = vunpack.c.l.s4 1966171168
      %v916 = vunpack.c.0.s8 %v915
      %v917 = vlaneseq
      %v918 = vshrl.u32 %v917, 7
      %v919 = vsub.s32 %v916, %v918
      %v920 = vrot.slane %v910, %v919
      %v921 = vcombine.high %v920, %v920
      %v923 = vunpack.c.l.s4 1966171168
      %v924 = vunpack.c.0.s8 %v923
      %v925 = vlaneseq
      %v926 = vshrl.u32 %v925, 7
      %v927 = vsub.s32 %v924, %v926
      %v928 = vrot.slane %v920, %v927
      %v930 = vunpack.c.l.s4 1966171168
      %v931 = vunpack.c.0.s8 %v930
      %v932 = vlaneseq
      %v933 = vshrl.u32 %v932, 7
      %v934 = vsub.s32 %v931, %v933
      %v935 = vrot.slane %v921, %v934
      %v938 = vmax.f32 %v928, 0.0
      %v939 = vmax.f32 %v935, 0.0
      %v942 = vcombine.low %v938, %v939
      %v944 = vunpack.c.l.s4 1966171168
      %v945 = vunpack.c.0.s8 %v944
      %v946 = vlaneseq
      %v947 = vshrl.u32 %v946, 7
      %v948 = vsub.s32 %v945, %v947
      %v949 = vrot.slane %v942, %v948
      %v951 = vunpack.c.l.s4 1966171168
      %v952 = vunpack.c.0.s8 %v951
      %v953 = vlaneseq
      %v954 = vshrl.u32 %v953, 7
      %v955 = vsub.s32 %v952, %v954
      %v956 = vrot.slane %v949, %v955
      %v957 = vsel %vm217, %v956, 0
      %959 = vmatprep.subr.mxu0 0.0
      %960 = vmatpush1.msra.mxu0 %v42
      %961 = vmatprep.subr.mxu0 0.0
      %962 = vmatpush1.msra.mxu0 %v43
      %963 = vmatprep.subr.mxu0 0.0
      %964 = vmatpush1.msra.mxu0 %v44
      %965 = vmatprep.subr.mxu0 0.0
      %966 = vmatpush1.msra.mxu0 %v45
      %967 = vmatprep.subr.mxu0 0.0
      %968 = vmatpush1.msra.mxu0 %v46
      %969 = vmatprep.subr.mxu0 0.0
      %970 = vmatpush1.msra.mxu0 %v47
      %971 = vmatprep.subr.mxu0 0.0
      %972 = vmatpush1.msra.mxu0 %v48
      %973 = vmatprep.subr.mxu0 0.0
      %974 = vmatpush1.msra.mxu0 %v49
      %975 = vmatprep.subr.mxu0 0.0
      %976 = vmatpush1.msra.mxu0 0.0
      %977 = vmatprep.subr.mxu0 0.0
      %978 = vmatpush1.msra.mxu0 0.0
      %979 = vmatprep.subr.mxu0 0.0
      %980 = vmatpush1.msra.mxu0 0.0
      %981 = vmatprep.subr.mxu0 0.0
      %982 = vmatpush1.msra.mxu0 0.0
      %983 = vmatprep.subr.mxu0 0.0
      %984 = vmatpush1.msra.mxu0 0.0
      %985 = vmatprep.subr.mxu0 0.0
      %986 = vmatpush1.msra.mxu0 0.0
      %987 = vmatprep.subr.mxu0 0.0
      %988 = vmatpush1.msra.mxu0 0.0
      %989 = vmatprep.subr.mxu0 0.0
      %990 = vmatpush1.msra.mxu0 0.0
      %991 = vmatprep.subr.mxu0 0.0
      %992 = vmatpush1.msra.mxu0 0.0
      %993 = vmatprep.subr.mxu0 0.0
      %994 = vmatpush1.msra.mxu0 0.0
      %995 = vmatprep.subr.mxu0 0.0
      %996 = vmatpush1.msra.mxu0 0.0
      %997 = vmatprep.subr.mxu0 0.0
      %998 = vmatpush1.msra.mxu0 0.0
      %999 = vmatprep.subr.mxu0 0.0
      %1000 = vmatpush1.msra.mxu0 0.0
      %1001 = vmatprep.subr.mxu0 0.0
      %1002 = vmatpush1.msra.mxu0 0.0
      %1003 = vmatprep.subr.mxu0 0.0
      %1004 = vmatpush1.msra.mxu0 0.0
      %1005 = vmatprep.subr.mxu0 0.0
      %1006 = vmatpush1.msra.mxu0 0.0
      %1007 = vmatprep.subr.mxu0 0.0
      %1008 = vmatpush1.msra.mxu0 0.0
      %1009 = vmatprep.subr.mxu0 0.0
      %1010 = vmatpush1.msra.mxu0 0.0
      %1011 = vmatprep.subr.mxu0 0.0
      %1012 = vmatpush1.msra.mxu0 0.0
      %1013 = vmatprep.subr.mxu0 0.0
      %1014 = vmatpush1.msra.mxu0 0.0
      %1015 = vmatprep.subr.mxu0 0.0
      %1016 = vmatpush1.msra.mxu0 0.0
      %1017 = vmatprep.subr.mxu0 0.0
      %1018 = vmatpush1.msra.mxu0 0.0
      %1019 = vmatprep.subr.mxu0 0.0
      %1020 = vmatpush1.msra.mxu0 0.0
      %1021 = vmatprep.subr.mxu0 0.0
      %1022 = vmatpush1.msra.mxu0 0.0
      %1023 = vmatprep.mubr.f32.mxu0 0.0
      %1024 = vmatmul.mubr.f32.gmra.mrb[0].mxu0 %v957
      %v1025 = vpop.f32.mrb[0].mxu0
      %v1026 = vadd.f32 0.0, %v1025
      %v1027 = vpop.f32.mrb[0].mxu0
      %1028 = vdwg.mxu0
      %v1031 = vunpack.c.l.s4 1966171168
      %v1032 = vunpack.c.0.s8 %v1031
      %v1033 = vlaneseq
      %v1034 = vshrl.u32 %v1033, 7
      %v1035 = vsub.s32 %v1032, %v1034
      %v1036 = vrot.slane %v1026, %v1035
      %v1037 = vcombine.high %v1036, %v1036
      %v1039 = vunpack.c.l.s4 1966171168
      %v1040 = vunpack.c.0.s8 %v1039
      %v1041 = vlaneseq
      %v1042 = vshrl.u32 %v1041, 7
      %v1043 = vsub.s32 %v1040, %v1042
      %v1044 = vrot.slane %v1036, %v1043
      %v1046 = vunpack.c.l.s4 1966171168
      %v1047 = vunpack.c.0.s8 %v1046
      %v1048 = vlaneseq
      %v1049 = vshrl.u32 %v1048, 7
      %v1050 = vsub.s32 %v1047, %v1049
      %v1051 = vrot.slane %v1037, %v1050
      %v1054 = vadd.f32 %v835, %v1044
      %v1055 = vadd.f32 %v836, %v1051
      %v1058 = vrot.slane %v1055, 7
      %v1059 = vsel %vm244, %v1058, %v1054
      %v1060 = vsel %vm87, %v1059, 0
      %1062 = vmatprep.subr.mxu0 0.0
      %1063 = vmatpush1.msra.mxu0 %v50
      %1064 = vmatprep.subr.mxu0 0.0
      %1065 = vmatpush1.msra.mxu0 %v51
      %1066 = vmatprep.subr.mxu0 0.0
      %1067 = vmatpush1.msra.mxu0 %v52
      %1068 = vmatprep.subr.mxu0 0.0
      %1069 = vmatpush1.msra.mxu0 %v53
      %1070 = vmatprep.subr.mxu0 0.0
      %1071 = vmatpush1.msra.mxu0 0.0
      %1072 = vmatprep.subr.mxu0 0.0
      %1073 = vmatpush1.msra.mxu0 0.0
      %1074 = vmatprep.subr.mxu0 0.0
      %1075 = vmatpush1.msra.mxu0 0.0
      %1076 = vmatprep.subr.mxu0 0.0
      %1077 = vmatpush1.msra.mxu0 0.0
      %1078 = vmatprep.subr.mxu0 0.0
      %1079 = vmatpush1.msra.mxu0 0.0
      %1080 = vmatprep.subr.mxu0 0.0
      %1081 = vmatpush1.msra.mxu0 0.0
      %1082 = vmatprep.subr.mxu0 0.0
      %1083 = vmatpush1.msra.mxu0 0.0
      %1084 = vmatprep.subr.mxu0 0.0
      %1085 = vmatpush1.msra.mxu0 0.0
      %1086 = vmatprep.subr.mxu0 0.0
      %1087 = vmatpush1.msra.mxu0 0.0
      %1088 = vmatprep.subr.mxu0 0.0
      %1089 = vmatpush1.msra.mxu0 0.0
      %1090 = vmatprep.subr.mxu0 0.0
      %1091 = vmatpush1.msra.mxu0 0.0
      %1092 = vmatprep.subr.mxu0 0.0
      %1093 = vmatpush1.msra.mxu0 0.0
      %1094 = vmatprep.subr.mxu0 0.0
      %1095 = vmatpush1.msra.mxu0 0.0
      %1096 = vmatprep.subr.mxu0 0.0
      %1097 = vmatpush1.msra.mxu0 0.0
      %1098 = vmatprep.subr.mxu0 0.0
      %1099 = vmatpush1.msra.mxu0 0.0
      %1100 = vmatprep.subr.mxu0 0.0
      %1101 = vmatpush1.msra.mxu0 0.0
      %1102 = vmatprep.subr.mxu0 0.0
      %1103 = vmatpush1.msra.mxu0 0.0
      %1104 = vmatprep.subr.mxu0 0.0
      %1105 = vmatpush1.msra.mxu0 0.0
      %1106 = vmatprep.subr.mxu0 0.0
      %1107 = vmatpush1.msra.mxu0 0.0
      %1108 = vmatprep.subr.mxu0 0.0
      %1109 = vmatpush1.msra.mxu0 0.0
      %1110 = vmatprep.subr.mxu0 0.0
      %1111 = vmatpush1.msra.mxu0 0.0
      %1112 = vmatprep.subr.mxu0 0.0
      %1113 = vmatpush1.msra.mxu0 0.0
      %1114 = vmatprep.subr.mxu0 0.0
      %1115 = vmatpush1.msra.mxu0 0.0
      %1116 = vmatprep.subr.mxu0 0.0
      %1117 = vmatpush1.msra.mxu0 0.0
      %1118 = vmatprep.subr.mxu0 0.0
      %1119 = vmatpush1.msra.mxu0 0.0
      %1120 = vmatprep.subr.mxu0 0.0
      %1121 = vmatpush1.msra.mxu0 0.0
      %1122 = vmatprep.subr.mxu0 0.0
      %1123 = vmatpush1.msra.mxu0 0.0
      %1124 = vmatprep.subr.mxu0 0.0
      %1125 = vmatpush1.msra.mxu0 0.0
      %1126 = vmatprep.mubr.f32.mxu0 0.0
      %1127 = vmatmul.mubr.f32.gmra.mrb[0].mxu0 %v1060
      %v1128 = vpop.f32.mrb[0].mxu0
      %v1129 = vadd.f32 0.0, %v1128
      %v1130 = vpop.f32.mrb[0].mxu0
      %1131 = vdwg.mxu0
      %v1134 = vunpack.c.l.s4 1966171168
      %v1135 = vunpack.c.0.s8 %v1134
      %v1136 = vlaneseq
      %v1137 = vshrl.u32 %v1136, 7
      %v1138 = vsub.s32 %v1135, %v1137
      %v1139 = vrot.slane %v1129, %v1138
      %v1140 = vcombine.high %v1139, %v1139
      %v1142 = vunpack.c.l.s4 1966171168
      %v1143 = vunpack.c.0.s8 %v1142
      %v1144 = vlaneseq
      %v1145 = vshrl.u32 %v1144, 7
      %v1146 = vsub.s32 %v1143, %v1145
      %v1147 = vrot.slane %v1139, %v1146
      %v1149 = vunpack.c.l.s4 1966171168
      %v1150 = vunpack.c.0.s8 %v1149
      %v1151 = vlaneseq
      %v1152 = vshrl.u32 %v1151, 7
      %v1153 = vsub.s32 %v1150, %v1152
      %v1154 = vrot.slane %v1140, %v1153
      %vm1157 = vcmask 1040384
      %v1158 = vsel %vm1157, %v1147, -inf
      %1159 = vmax.xlane.f32.xlu0 %v1158
      %v1160 = vpop.xlane.xlu0 %1159
      %v1161 = vsel %vm1157, %v1154, -inf
      %1162 = vmax.xlane.f32.xlu0 %v1161
      %v1163 = vpop.xlane.xlu0 %1162
      %vm1164 = vcmp.eq.f32.partialorder %v1147, %v1160
      %vm1165 = vcmp.eq.f32.partialorder %v1154, %v1163
      %v1166 = vsel %vm1164, %v62, 128.0
      %v1167 = vsel %vm1165, %v62, 128.0
      %v1168 = vsel %vm1157, %v1166, inf
      %1169 = vmin.xlane.f32.xlu0 %v1168
      %v1170 = vpop.xlane.xlu0 %1169
      %v1171 = vsel %vm1157, %v1167, inf
      %1172 = vmin.xlane.f32.xlu0 %v1171
      %v1173 = vpop.xlane.xlu0 %1172
      %v1174 = vcvt.f32.s32.to.zero.pseudo %v1170
      %v1175 = vcvt.f32.s32.to.zero.pseudo %v1173
      %v1176 = vstv %s231
      %vm1177 = vcmp.eq.s32.totalorder %v61, %v1176
      %v1178 = vsel %vm1177, 1, 0
      %vm1179 = vcmp.eq.s32.totalorder %v1178, 1
      %v1180 = vsel %vm1179, %v1174, %v238
      %v1181 = vsel %vm1179, %v1175, %v239
      %vm1182 = vcmp.eq.f32.partialorder %v62, %v1170
      %vm1183 = vcmp.eq.f32.partialorder %v62, %v1173
      %v1184 = vsel %vm1182, 1, 0
      %v1185 = vsel %vm1183, 1, 0
      %v1186 = vcvt.s32.f32 %v1184
      %v1187 = vcvt.s32.f32 %v1185
      %v1190 = vrot.slane %v1187, 7
      %v1191 = vsel %vm244, %v1190, %v1186
      %1193 = vmatprep.subr.mxu0 0.0
      %1194 = vmatpush1.xpose.msra.mxu0 %v54
      %1195 = vmatprep.subr.mxu0 0.0
      %1196 = vmatpush1.xpose.msra.mxu0 %v55
      %1197 = vmatprep.subr.mxu0 0.0
      %1198 = vmatpush1.xpose.msra.mxu0 %v56
      %1199 = vmatprep.subr.mxu0 0.0
      %1200 = vmatpush1.xpose.msra.mxu0 %v57
      %1201 = vmatprep.subr.mxu0 0.0
      %1202 = vmatpush1.xpose.msra.mxu0 0.0
      %1203 = vmatprep.subr.mxu0 0.0
      %1204 = vmatpush1.xpose.msra.mxu0 0.0
      %1205 = vmatprep.subr.mxu0 0.0
      %1206 = vmatpush1.xpose.msra.mxu0 0.0
      %1207 = vmatprep.subr.mxu0 0.0
      %1208 = vmatpush1.xpose.msra.mxu0 0.0
      %1209 = vmatprep.subr.mxu0 0.0
      %1210 = vmatpush1.xpose.msra.mxu0 0.0
      %1211 = vmatprep.subr.mxu0 0.0
      %1212 = vmatpush1.xpose.msra.mxu0 0.0
      %1213 = vmatprep.subr.mxu0 0.0
      %1214 = vmatpush1.xpose.msra.mxu0 0.0
      %1215 = vmatprep.subr.mxu0 0.0
      %1216 = vmatpush1.xpose.msra.mxu0 0.0
      %1217 = vmatprep.subr.mxu0 0.0
      %1218 = vmatpush1.xpose.msra.mxu0 0.0
      %1219 = vmatprep.subr.mxu0 0.0
      %1220 = vmatpush1.xpose.msra.mxu0 0.0
      %1221 = vmatprep.subr.mxu0 0.0
      %1222 = vmatpush1.xpose.msra.mxu0 0.0
      %1223 = vmatprep.subr.mxu0 0.0
      %1224 = vmatpush1.xpose.msra.mxu0 0.0
      %1225 = vmatprep.subr.mxu0 0.0
      %1226 = vmatpush1.xpose.msra.mxu0 0.0
      %1227 = vmatprep.subr.mxu0 0.0
      %1228 = vmatpush1.xpose.msra.mxu0 0.0
      %1229 = vmatprep.subr.mxu0 0.0
      %1230 = vmatpush1.xpose.msra.mxu0 0.0
      %1231 = vmatprep.subr.mxu0 0.0
      %1232 = vmatpush1.xpose.msra.mxu0 0.0
      %1233 = vmatprep.subr.mxu0 0.0
      %1234 = vmatpush1.xpose.msra.mxu0 0.0
      %1235 = vmatprep.subr.mxu0 0.0
      %1236 = vmatpush1.xpose.msra.mxu0 0.0
      %1237 = vmatprep.subr.mxu0 0.0
      %1238 = vmatpush1.xpose.msra.mxu0 0.0
      %1239 = vmatprep.subr.mxu0 0.0
      %1240 = vmatpush1.xpose.msra.mxu0 0.0
      %1241 = vmatprep.subr.mxu0 0.0
      %1242 = vmatpush1.xpose.msra.mxu0 0.0
      %1243 = vmatprep.subr.mxu0 0.0
      %1244 = vmatpush1.xpose.msra.mxu0 0.0
      %1245 = vmatprep.subr.mxu0 0.0
      %1246 = vmatpush1.xpose.msra.mxu0 0.0
      %1247 = vmatprep.subr.mxu0 0.0
      %1248 = vmatpush1.xpose.msra.mxu0 0.0
      %1249 = vmatprep.subr.mxu0 0.0
      %1250 = vmatpush1.xpose.msra.mxu0 0.0
      %1251 = vmatprep.subr.mxu0 0.0
      %1252 = vmatpush1.xpose.msra.mxu0 0.0
      %1253 = vmatprep.subr.mxu0 0.0
      %1254 = vmatpush1.xpose.msra.mxu0 0.0
      %1255 = vmatprep.subr.mxu0 0.0
      %1256 = vmatpush1.xpose.msra.mxu0 0.0
      %1257 = vmatprep.mubr.f32.mxu0 0.0
      %1258 = vmatmul.mubr.f32.gmra.mrb[0].mxu0 %v1191
      %v1259 = vpop.f32.mrb[0].mxu0
      %v1260 = vadd.f32 0.0, %v1259
      %v1261 = vpop.f32.mrb[0].mxu0
      %1262 = vdwg.mxu0
      %v1265 = vunpack.c.l.s4 1966171168
      %v1266 = vunpack.c.0.s8 %v1265
      %v1267 = vlaneseq
      %v1268 = vshrl.u32 %v1267, 7
      %v1269 = vsub.s32 %v1266, %v1268
      %v1270 = vrot.slane %v1260, %v1269
      %v1271 = vcombine.high %v1270, %v1270
      %v1273 = vunpack.c.l.s4 1966171168
      %v1274 = vunpack.c.0.s8 %v1273
      %v1275 = vlaneseq
      %v1276 = vshrl.u32 %v1275, 7
      %v1277 = vsub.s32 %v1274, %v1276
      %v1278 = vrot.slane %v1270, %v1277
      %v1280 = vunpack.c.l.s4 1966171168
      %v1281 = vunpack.c.0.s8 %v1280
      %v1282 = vlaneseq
      %v1283 = vshrl.u32 %v1282, 7
      %v1284 = vsub.s32 %v1281, %v1283
      %v1285 = vrot.slane %v1271, %v1284
    $region38: #{generate_tokens.1} parent=1 // loop_footer
      %s235 = sadd.s32 1, %s231
    $region39: #{generate_tokens.1} parent=1 // loop_footer_branch
      %230 = sbr.rel target = $region35
    $region40: #{generate_tokens.1} parent=1 // loop_exit
      _
    %vm1288 = vcmask 57344
    %1289 = vst.msk [vmem:[#allocation3] sm:$0x1] %vm1288, %v238
    %1290 = vst.msk [vmem:[#allocation3 + $0x1] sm:$0x1] %vm1288, %v239
    // Predicated region
    $region41: #{generate_tokens.1} parent=1 // pred_check
      _
    $region42: #{generate_tokens.1} parent=1 // pred_check_branch
      %1292 = sbr.rel (0) target = $region44
    $region43: #{generate_tokens.1} parent=1 // pred_region
      %s1294 = ssub.s32 32, 32
      %1295 = vsyncadd [#allocation4], %s1294
      %s1296 = sshll.u32 [#allocation3], 4
      %s1297 = int_to_ptr.vmem [resolvable:$true] %s1296
      %1302 = dma.vmem_to_hbm [thread:$0]  %s1297, 32, %s8, [#allocation4], 16, 16, 1
    $region44: #{generate_tokens.1} parent=1 // pred_fallthru
      _
    // Predicated region
    $region45: #{generate_tokens.1} parent=1 // pred_check
      _
    $region46: #{generate_tokens.1} parent=1 // pred_check_branch
      %1304 = sbr.rel (0) target = $region48
    $region47: #{generate_tokens.1} parent=1 // pred_region
      %1305 = dma.done [#allocation4], 32
    $region48: #{generate_tokens.1} parent=1 // pred_fallthru
      _
    %1306 = vsyncpa [#allocation4], 1

</llo_original>
